<compile_context>
chip_gen: v6e
topology: v6e:2x2x1
jax: 0.10.0
libtpu: 0.0.40
codegen_flags: <defaults>
</compile_context>

<pallas_src>
import functools

import jax
import jax.numpy as jnp
from jax.experimental import pallas as pl
from jax.experimental.pallas import tpu as pltpu

LANE = 128            # vreg lane width (last dim)
SUBLANE = 8           # vreg sublane count
MAX_BLOCK_ROWS = 512  # (512,128) f32 = 256 KiB per input per grid step


def _round_up(x, m):
    return -(-x // m) * m


def _focal_loss_kernel(pred_ref, tgt_ref, out_ref, *, gamma, alpha):
    i = pl.program_id(1)  # inner reduction axis

    @pl.when(i == 0)
    def _():
        out_ref[...] = jnp.zeros_like(out_ref)

    p = pred_ref[...]
    t = tgt_ref[...]

    # F.binary_cross_entropy(reduction='none'): log terms clamped at -100.
    log_p = jnp.maximum(jnp.log(p), -100.0)
    log_1mp = jnp.maximum(jnp.log(1.0 - p), -100.0)
    ce = -(t * log_p + (1.0 - t) * log_1mp)

    # p_t = exp(-ce); for 0/1 targets this equals t*p + (1-t)*(1-p) exactly,
    # so we use the VPU formula and skip one EUP exp per element.
    p_t = t * p + (1.0 - t) * (1.0 - p)
    alpha_t = (1.0 - alpha) + t * (2.0 * alpha - 1.0)
    f = alpha_t * (1.0 - p_t) ** gamma * ce  # gamma is a Python int -> integer_pow

    # Pure-VPU partial-sum accumulation into the resident (8, LANE) output block.
    out_ref[...] += f.reshape(-1, SUBLANE, f.shape[-1]).sum(axis=0)


def focal_loss(predictions, targets, gamma=2, alpha=0.4):
    """Pallas implementation of FocalLoss.forward. Returns a scalar (f32)."""
    assert predictions.shape == targets.shape
    n_valid = predictions.size

    pred_flat = predictions.reshape(-1).astype(jnp.float32)
    tgt_flat = targets.reshape(-1).astype(jnp.float32)

    # Choose tiling: large tiles for big inputs, shrink for tiny ones.
    rows0 = _round_up(_round_up(n_valid, LANE) // LANE, SUBLANE)
    if rows0 >= 2 * MAX_BLOCK_ROWS:
        nc, br = 2, MAX_BLOCK_ROWS       # 2-way "parallel" split (both v7x TCs)
    else:
        nc, br = 1, min(MAX_BLOCK_ROWS, rows0)
    rows = _round_up(rows0, nc * br)
    tiles_per_core = rows // (nc * br)

    # Pad BOTH tensors with 1.0: p=1, t=1 => ce=0, p_t=1 => f=0 (no mask needed).
    total = rows * LANE
    pad = total - n_valid
    if pad:
        pred_flat = jnp.pad(pred_flat, (0, pad), constant_values=1.0)
        tgt_flat = jnp.pad(tgt_flat, (0, pad), constant_values=1.0)

    pred2d = pred_flat.reshape(rows, LANE)
    tgt2d = tgt_flat.reshape(rows, LANE)

    in_spec = pl.BlockSpec((br, LANE), lambda c, i: (c * tiles_per_core + i, 0))
    out_spec = pl.BlockSpec((SUBLANE, LANE), lambda c, i: (c, 0))

    kernel = functools.partial(_focal_loss_kernel, gamma=gamma, alpha=alpha)

    partial_sums = pl.pallas_call(
        kernel,
        out_shape=jax.ShapeDtypeStruct((nc * SUBLANE, LANE), jnp.float32),
        grid_spec=pltpu.PrefetchScalarGridSpec(
            num_scalar_prefetch=0,
            grid=(nc, tiles_per_core),
            in_specs=[in_spec, in_spec],
            out_specs=out_spec,
        ),
        compiler_params=pltpu.CompilerParams(
            dimension_semantics=("parallel", "arbitrary")),
    )(pred2d, tgt2d)

    # Tiny final reduction (<= 2*8*128 f32) + mean + *1000 in plain XLA.
    return (jnp.sum(partial_sums) / n_valid) * 1000.0


def focal_loss_ref(predictions, targets, gamma=2, alpha=0.4):
    """Pure-JAX reference mirroring the PyTorch module."""
    p = predictions.astype(jnp.float32)
    t = targets.astype(jnp.float32)
    ce = -(t * jnp.maximum(jnp.log(p), -100.0)
           + (1.0 - t) * jnp.maximum(jnp.log(1.0 - p), -100.0))
    p_t = jnp.exp(-ce)
    alpha_t = (1.0 - alpha) + t * (2.0 * alpha - 1.0)
    return jnp.mean(alpha_t * (1.0 - p_t) ** gamma * ce) * 1000.0


if __name__ == "__main__":
    key = jax.random.PRNGKey(0)
    k1, k2, k3, k4 = jax.random.split(key, 4)

    # Small shape consistent with a generic elementwise loss: (2, 4, 16, 16).
    shape = (2, 4, 16, 16)
    predictions = jax.nn.sigmoid(jax.random.normal(k1, shape, jnp.float32))
    targets = (jax.random.uniform(k2, shape) > 0.5).astype(jnp.float32)

    loss = jax.block_until_ready(focal_loss(predictions, targets, gamma=2, alpha=0.4))
    ref = focal_loss_ref(predictions, targets, gamma=2, alpha=0.4)
    assert jnp.allclose(loss, ref, rtol=1e-5, atol=1e-5), (loss, ref)

    # Medium shape exercising the multi-tile + 2-way parallel + padding path.
    shape2 = (4, 3, 128, 128)
    p2 = jax.nn.sigmoid(jax.random.normal(k3, shape2, jnp.float32))
    t2 = (jax.random.uniform(k4, shape2) > 0.5).astype(jnp.float32)
    loss2 = jax.block_until_ready(focal_loss(p2, t2, gamma=2, alpha=0.4))
    ref2 = focal_loss_ref(p2, t2, gamma=2, alpha=0.4)
    assert jnp.allclose(loss2, ref2, rtol=1e-4, atol=1e-4), (loss2, ref2)

    print("KERNEL_OK")
</pallas_src>

<mosaic_0001>
module attributes {stable_mosaic.version = 11 : i64} {
  func.func @_focal_loss_kernel(%arg0: i32, %arg1: i32, %arg2: memref<16x128xf32, #tpu.memory_space<vmem>>, %arg3: memref<16x128xf32, #tpu.memory_space<vmem>>, %arg4: memref<8x128xf32, #tpu.memory_space<vmem>>) attributes {dimension_semantics = [#tpu.dimension_semantics<parallel>, #tpu.dimension_semantics<arbitrary>], iteration_bounds = array<i64: 1, 1>, scalar_prefetch = 0 : i64, scratch_operands = 0 : i64, tpu.core_type = #tpu.core_type<tc>, window_params = [{transform_indices = @transform_0, window_bounds = array<i64: 16, 128>}, {transform_indices = @transform_1, window_bounds = array<i64: 16, 128>}, {transform_indices = @transform_2, window_bounds = array<i64: 8, 128>}]} {
    %c0_i32 = arith.constant 0 : i32
    %0 = arith.cmpi eq, %arg1, %c0_i32 : i32
    %1 = arith.extui %0 : i1 to i32
    %c0_i32_0 = arith.constant 0 : i32
    %2 = arith.cmpi ne, %1, %c0_i32_0 : i32
    scf.if %2 {
      %cst_18 = arith.constant 0.000000e+00 : f32
      %41 = vector.broadcast %cst_18 : f32 to vector<8x128xf32>
      %c0_19 = arith.constant 0 : index
      %c0_20 = arith.constant 0 : index
      %42 = vector.load %arg4[%c0_19, %c0_20] : memref<8x128xf32, #tpu.memory_space<vmem>>, vector<8x128xf32>
      tpu.vector_store %arg4[%c0_19, %c0_20], %41 {strides = array<i32>} : memref<8x128xf32, #tpu.memory_space<vmem>>, vector<8x128xf32>,
    } else {
    }
    %c0 = arith.constant 0 : index
    %c0_1 = arith.constant 0 : index
    %3 = vector.load %arg2[%c0, %c0_1] : memref<16x128xf32, #tpu.memory_space<vmem>>, vector<16x128xf32>
    %c0_2 = arith.constant 0 : index
    %c0_3 = arith.constant 0 : index
    %4 = vector.load %arg3[%c0_2, %c0_3] : memref<16x128xf32, #tpu.memory_space<vmem>>, vector<16x128xf32>
    %5 = math.log %3 : vector<16x128xf32>
    %cst = arith.constant -1.000000e+02 : f32
    %6 = vector.broadcast %cst : f32 to vector<16x128xf32>
    %7 = arith.maximumf %5, %6 : vector<16x128xf32>
    %cst_4 = arith.constant 1.000000e+00 : f32
    %8 = vector.broadcast %cst_4 : f32 to vector<16x128xf32>
    %9 = arith.subf %8, %3 : vector<16x128xf32>
    %10 = math.log %9 : vector<16x128xf32>
    %cst_5 = arith.constant -1.000000e+02 : f32
    %11 = vector.broadcast %cst_5 : f32 to vector<16x128xf32>
    %12 = arith.maximumf %10, %11 : vector<16x128xf32>
    %13 = arith.mulf %4, %7 : vector<16x128xf32>
    %cst_6 = arith.constant 1.000000e+00 : f32
    %14 = vector.broadcast %cst_6 : f32 to vector<16x128xf32>
    %15 = arith.subf %14, %4 : vector<16x128xf32>
    %16 = arith.mulf %15, %12 : vector<16x128xf32>
    %17 = arith.addf %13, %16 : vector<16x128xf32>
    %cst_7 = arith.constant 0.000000e+00 : f32
    %18 = vector.broadcast %cst_7 : f32 to vector<16x128xf32>
    %19 = arith.subf %18, %17 : vector<16x128xf32>
    %20 = arith.mulf %4, %3 : vector<16x128xf32>
    %cst_8 = arith.constant 1.000000e+00 : f32
    %21 = vector.broadcast %cst_8 : f32 to vector<16x128xf32>
    %22 = arith.subf %21, %4 : vector<16x128xf32>
    %cst_9 = arith.constant 1.000000e+00 : f32
    %23 = vector.broadcast %cst_9 : f32 to vector<16x128xf32>
    %24 = arith.subf %23, %3 : vector<16x128xf32>
    %25 = arith.mulf %22, %24 : vector<16x128xf32>
    %26 = arith.addf %20, %25 : vector<16x128xf32>
    %cst_10 = arith.constant -2.000000e-01 : f32
    %27 = vector.broadcast %cst_10 : f32 to vector<16x128xf32>
    %28 = arith.mulf %4, %27 : vector<16x128xf32>
    %cst_11 = arith.constant 6.000000e-01 : f32
    %29 = vector.broadcast %cst_11 : f32 to vector<16x128xf32>
    %30 = arith.addf %29, %28 : vector<16x128xf32>
    %cst_12 = arith.constant 1.000000e+00 : f32
    %31 = vector.broadcast %cst_12 : f32 to vector<16x128xf32>
    %32 = arith.subf %31, %26 : vector<16x128xf32>
    %33 = arith.mulf %32, %32 : vector<16x128xf32>
    %34 = arith.mulf %30, %33 : vector<16x128xf32>
    %35 = arith.mulf %34, %19 : vector<16x128xf32>
    %c0_13 = arith.constant 0 : index
    %c0_14 = arith.constant 0 : index
    %36 = vector.load %arg4[%c0_13, %c0_14] : memref<8x128xf32, #tpu.memory_space<vmem>>, vector<8x128xf32>
    %37 = vector.shape_cast %35 : vector<16x128xf32> to vector<2x8x128xf32>
    %cst_15 = arith.constant dense<0.000000e+00> : vector<8x128xf32>
    %38 = vector.multi_reduction <add>, %37, %cst_15 [0] : vector<2x8x128xf32> to vector<8x128xf32>
    %39 = arith.addf %36, %38 : vector<8x128xf32>
    %c0_16 = arith.constant 0 : index
    %c0_17 = arith.constant 0 : index
    %40 = vector.load %arg4[%c0_16, %c0_17] : memref<8x128xf32, #tpu.memory_space<vmem>>, vector<8x128xf32>
    tpu.vector_store %arg4[%c0_16, %c0_17], %39 {strides = array<i32>} : memref<8x128xf32, #tpu.memory_space<vmem>>, vector<8x128xf32>,
    return
  }
  func.func @transform_0(%arg0: i32, %arg1: i32) -> (i32, i32) {
    %c1_i32 = arith.constant 1 : i32
    %0 = arith.muli %arg0, %c1_i32 : i32
    %1 = arith.addi %0, %arg1 : i32
    %c0_i32 = arith.constant 0 : i32
    %c0_i32_0 = arith.constant 0 : i32
    return %1, %c0_i32 : i32, i32
  }
  func.func @transform_1(%arg0: i32, %arg1: i32) -> (i32, i32) {
    %c1_i32 = arith.constant 1 : i32
    %0 = arith.muli %arg0, %c1_i32 : i32
    %1 = arith.addi %0, %arg1 : i32
    %c0_i32 = arith.constant 0 : i32
    %c0_i32_0 = arith.constant 0 : i32
    return %1, %c0_i32 : i32, i32
  }
  func.func @transform_2(%arg0: i32, %arg1: i32) -> (i32, i32) {
    %c0_i32 = arith.constant 0 : i32
    %c0_i32_0 = arith.constant 0 : i32
    return %arg0, %c0_i32 : i32, i32
  }
}

</mosaic_0001>

<llo_original>
// kernel: tpu_custom_call.1
$region0: #{tpu_custom_call.1}
  #allocation0 [shape = 'u32[]', space=smem, size = 0x4, offset = 0x4, fixed_abs, tag = 'smem constant byte address 0x4 - core index']
  #allocation1 [shape = 'u32[144,128]{1,0:T(1,128)}', space=vmem, size = 0x12000, scoped, tag = 'internal scratch']
  %s0 = inlined_call_operand.hbm [shape: f32[16,128], index: 0, kind: input, shape index: {}]
  %s1 = inlined_call_operand.hbm [shape: f32[16,128], index: 1, kind: input, shape index: {}]
  %s2 = inlined_call_operand.hbm [shape: f32[8,128], index: 2, kind: output, shape index: {}]
  %s3 = sld [smem:[#allocation0]]
  $region30: #{tpu_custom_call.1} parent=0
    _
  %s5 = ssub.s32 1, %s3
  %s6 = scalar_select 0, %s5, %s3
  $region1: #{tpu_custom_call.1} parent=0
    #allocation2 [shape = 'u8[8192]{0}', space=vmem, size = 0x2000, scoped, tag = 'input window, operand 0, single buffered']
    #allocation3 [shape = 's32[1]{0}', space=sflag, size = 0x4, scoped, tag = 'scoped memory for tpu_custom_call.1']
    #allocation4 [shape = 's32[1]{0}', space=sflag, size = 0x4, scoped, tag = 'scoped memory for tpu_custom_call.1']
    #allocation5 [shape = 'u8[8192]{0}', space=vmem, size = 0x2000, scoped, tag = 'input window, operand 1, single buffered']
    #allocation6 [shape = 's32[1]{0}', space=sflag, size = 0x4, scoped, tag = 'scoped memory for tpu_custom_call.1']
    #allocation7 [shape = 'u8[4096]{0}', space=vmem, size = 0x1000, scoped, tag = 'output window, operand 0, single buffered']
    %7 = vsyncpa [#allocation3], 0
    %8 = vsyncpa [#allocation6], 0
    %9 = vsyncpa [#allocation4], 0
    // Predicated region
    $region2: #{tpu_custom_call.1} parent=1 // pred_check
      _
    $region3: #{tpu_custom_call.1} parent=1 // pred_check_branch
      %11 = sbr.rel (0) target = $region5
    $region4: #{tpu_custom_call.1} parent=1 // pred_region
      %s12 = sadd.s32 0, 0
      %s13 = smul.u32 2, %s12
      %s15 = ssub.s32 256, 256
      %16 = vsyncadd [#allocation3], %s15
      %s17 = smul.addr %s13, 128
      %s18 = scalar_lea.hbm %s0, %s17
      %s19 = sshll.u32 [#allocation2], 4
      %s20 = int_to_ptr.vmem [resolvable:$true] %s19
      %25 = dma.hbm_to_vmem [thread:$0]  %s18, 256, %s20, [#allocation3], 128, 128, 8
    $region5: #{tpu_custom_call.1} parent=1 // pred_fallthru
      _
    // Predicated region
    $region6: #{tpu_custom_call.1} parent=1 // pred_check
      _
    $region7: #{tpu_custom_call.1} parent=1 // pred_check_branch
      %27 = sbr.rel (0) target = $region9
    $region8: #{tpu_custom_call.1} parent=1 // pred_region
      %s28 = sadd.s32 0, 0
      %s29 = smul.u32 2, %s28
      %s31 = ssub.s32 256, 256
      %32 = vsyncadd [#allocation6], %s31
      %s33 = smul.addr %s29, 128
      %s34 = scalar_lea.hbm %s1, %s33
      %s35 = sshll.u32 [#allocation5], 4
      %s36 = int_to_ptr.vmem [resolvable:$true] %s35
      %41 = dma.hbm_to_vmem [thread:$0]  %s34, 256, %s36, [#allocation6], 128, 128, 8
    $region9: #{tpu_custom_call.1} parent=1 // pred_fallthru
      _
    // Predicated region
    $region10: #{tpu_custom_call.1} parent=1 // pred_check
      _
    $region11: #{tpu_custom_call.1} parent=1 // pred_check_branch
      %43 = sbr.rel (0) target = $region13
    $region12: #{tpu_custom_call.1} parent=1 // pred_region
      %44 = dma.done [#allocation3], 256
    $region13: #{tpu_custom_call.1} parent=1 // pred_fallthru
      _
    // Predicated region
    $region14: #{tpu_custom_call.1} parent=1 // pred_check
      _
    $region15: #{tpu_custom_call.1} parent=1 // pred_check_branch
      %46 = sbr.rel (0) target = $region17
    $region16: #{tpu_custom_call.1} parent=1 // pred_region
      %47 = dma.done [#allocation6], 256
    $region17: #{tpu_custom_call.1} parent=1 // pred_fallthru
      _
    %s48 = sadd.s32 0, 0
    %s49 = smul.u32 2, %s48
    %s50 = sadd.s32 0, 0
    %s51 = smul.u32 2, %s50
    %p52 = scmp.eq.s32.totalorder 0, 0
    // Predicated region
    $region18: #{tpu_custom_call.1} parent=1 // pred_check
      %p53 = pneg %p52
    $region19: #{tpu_custom_call.1} parent=1 // pred_check_branch
      %55 = sbr.rel (%p53) target = $region21
    $region20: #{tpu_custom_call.1} parent=1 // pred_region
      %56 = vst [vmem:[#allocation7] sm:$0xff] 0.0
    $region21: #{tpu_custom_call.1} parent=1 // pred_fallthru
      _
    %v57 = vld [vmem:[#allocation2] sm:$0xff]
    %v58 = vld [vmem:[#allocation2 + $0x8] sm:$0xff]
    %v59 = vld [vmem:[#allocation5] sm:$0xff]
    %v60 = vld [vmem:[#allocation5 + $0x8] sm:$0xff]
    %v61 = vlog2.pop %v57
    %v62 = vmul.f32 %v61, 0.6931472
    %v63 = vlog2.pop %v58
    %v64 = vmul.f32 %v63, 0.6931472
    %v65 = vmax.f32 %v62, -100.0
    %v66 = vmax.f32 %v64, -100.0
    %v67 = vsub.f32 1.0, %v57
    %v68 = vsub.f32 1.0, %v58
    %v69 = vlog2.pop %v67
    %v70 = vmul.f32 %v69, 0.6931472
    %v71 = vlog2.pop %v68
    %v72 = vmul.f32 %v71, 0.6931472
    %v73 = vmax.f32 %v70, -100.0
    %v74 = vmax.f32 %v72, -100.0
    %v75 = vmul.f32 %v59, %v65
    %v76 = vmul.f32 %v60, %v66
    %v77 = vsub.f32 1.0, %v59
    %v78 = vsub.f32 1.0, %v60
    %v79 = vmul.f32 %v77, %v73
    %v80 = vmul.f32 %v78, %v74
    %v81 = vadd.f32 %v75, %v79
    %v82 = vadd.f32 %v76, %v80
    %v83 = vsub.f32 0.0, %v81
    %v84 = vsub.f32 0.0, %v82
    %v85 = vmul.f32 %v59, %v57
    %v86 = vmul.f32 %v60, %v58
    %v87 = vmul.f32 %v77, %v67
    %v88 = vmul.f32 %v78, %v68
    %v89 = vadd.f32 %v85, %v87
    %v90 = vadd.f32 %v86, %v88
    %v91 = vmul.f32 %v59, -0.2
    %v92 = vmul.f32 %v60, -0.2
    %v93 = vadd.f32 %v91, 0.6
    %v94 = vadd.f32 %v92, 0.6
    %v95 = vsub.f32 1.0, %v89
    %v96 = vsub.f32 1.0, %v90
    %v97 = vmul.f32 %v95, %v95
    %v98 = vmul.f32 %v96, %v96
    %v99 = vmul.f32 %v93, %v97
    %v100 = vmul.f32 %v94, %v98
    %v101 = vmul.f32 %v99, %v83
    %v102 = vmul.f32 %v100, %v84
    %v103 = vld [vmem:[#allocation7] sm:$0xff]
    %v104 = vadd.f32 %v101, %v102
    %v105 = vadd.f32 %v103, %v104
    %106 = vst [vmem:[#allocation7] sm:$0xff] %v105
    // Predicated region
    $region22: #{tpu_custom_call.1} parent=1 // pred_check
      _
    $region23: #{tpu_custom_call.1} parent=1 // pred_check_branch
      %108 = sbr.rel (0) target = $region25
    $region24: #{tpu_custom_call.1} parent=1 // pred_region
      %s110 = ssub.s32 128, 128
      %111 = vsyncadd [#allocation4], %s110
      %s113 = sshll.u32 [#allocation7], 4
      %s114 = int_to_ptr.vmem [resolvable:$true] %s113
      %116 = dma.vmem_to_hbm [thread:$0]  %s114, 128, %s2, [#allocation4]
    $region25: #{tpu_custom_call.1} parent=1 // pred_fallthru
      _
    // Predicated region
    $region26: #{tpu_custom_call.1} parent=1 // pred_check
      _
    $region27: #{tpu_custom_call.1} parent=1 // pred_check_branch
      %118 = sbr.rel (0) target = $region29
    $region28: #{tpu_custom_call.1} parent=1 // pred_region
      %119 = dma.done [#allocation4], 128
    $region29: #{tpu_custom_call.1} parent=1 // pred_fallthru
      _
    %120 = vsyncpa [#allocation3], 1
    %121 = vsyncpa [#allocation6], 1
    %122 = vsyncpa [#allocation4], 1

</llo_original>
